<compile_context>
chip_gen: v7x
topology: tpu7x:2x2x1
jax: 0.10.0
libtpu: 0.0.40
codegen_flags: <defaults>
</compile_context>

<pallas_src>
import numpy as np
import jax
import jax.numpy as jnp
from jax.experimental import pallas as pl
from jax.experimental.pallas import tpu as pltpu  # noqa: F401  (TPU backend)

LANE = 128  # TPU lane width; pad the hidden dim to a multiple of this.


# ---------------------------------------------------------------------------
# Pallas kernel: both hooked SAGEConv layers in one invocation (no grid)
# ---------------------------------------------------------------------------
def fused_sage_kernel(xA_ref, adjA_ref, xG_ref, adjG_ref,
                      wrA_ref, wlA_ref, bA_ref,
                      wrG_ref, wlG_ref, bG_ref,
                      outA_ref, outG_ref):
    def sage(x_ref, adj_ref, wr_ref, wl_ref, b_ref, out_ref):
        x = x_ref[...]                                    # (N, F) bf16
        # mean over neighbors (MXU matmul, f32 accumulation)
        agg = jnp.dot(adj_ref[...], x,
                      preferred_element_type=jnp.float32)  # (N, F) f32
        # two accumulating MXU dots — no lane-axis concat needed
        out = jnp.dot(x, wr_ref[...], preferred_element_type=jnp.float32)
        out = out + jnp.dot(agg.astype(wl_ref.dtype), wl_ref[...],
                            preferred_element_type=jnp.float32)
        out = out + b_ref[...]                            # (1, Hp) broadcast
        out_ref[...] = out.astype(out_ref.dtype)          # lane-dense store

    sage(xA_ref, adjA_ref, wrA_ref, wlA_ref, bA_ref, outA_ref)
    sage(xG_ref, adjG_ref, wrG_ref, wlG_ref, bG_ref, outG_ref)


def fused_sage_conv(xA, adjA, xG, adjG, wrA, wlA, bA, wrG, wlG, bG):
    """Both hooked SAGEConv layers in one Pallas call (single invocation,
    whole arrays resident in VMEM — tiny shapes, no pipelining needed)."""
    N = xA.shape[0]
    Hp = wrA.shape[-1]
    return pl.pallas_call(
        fused_sage_kernel,
        out_shape=(jax.ShapeDtypeStruct((N, Hp), jnp.float32),
                   jax.ShapeDtypeStruct((N, Hp), jnp.float32)),
    )(xA, adjA, xG, adjG, wrA, wlA, bA, wrG, wlG, bG)


# ---------------------------------------------------------------------------
# FeatureExtractor equivalent
# ---------------------------------------------------------------------------
class FeatureExtractorPallas:
    """Mirrors FeatureExtractor(model, use_mono=False): runs the model forward
    and returns the outputs of the 'Asage' and 'Gsage' SAGEConv layers.
    The downstream model continuation (pooling + MLP) is discarded by
    FeatureExtractor, so it is not computed here."""

    def __init__(self, params):
        self.layers = ["Asage", "Gsage"]
        F, self.H = params["A_wl"].shape
        self.Hp = ((self.H + LANE - 1) // LANE) * LANE  # lane-dense padded width

        def pad_w(w):  # (F, H) -> (F, Hp) bf16, zero-padded columns
            return jnp.pad(w, ((0, 0), (0, self.Hp - self.H))).astype(jnp.bfloat16)

        def pad_b(b):  # (1, H) -> (1, Hp) f32 (added after f32 accumulation)
            return jnp.pad(b, ((0, 0), (0, self.Hp - self.H))).astype(jnp.float32)

        self.wrA = pad_w(params["A_wr"])
        self.wlA = pad_w(params["A_wl"])
        self.bA = pad_b(params["A_b"])
        self.wrG = pad_w(params["G_wr"])
        self.wlG = pad_w(params["G_wl"])
        self.bG = pad_b(params["G_b"])
        self._fwd = jax.jit(self._forward_impl)

    def _forward_impl(self, xA, adjA, xG, adjG):
        # bf16 inputs (halves HBM/VMEM traffic; MXU-native on v6e/v7x);
        # f32 accumulation and f32 outputs.
        outA, outG = fused_sage_conv(
            xA.astype(jnp.bfloat16), adjA.astype(jnp.bfloat16),
            xG.astype(jnp.bfloat16), adjG.astype(jnp.bfloat16),
            self.wrA, self.wlA, self.bA,
            self.wrG, self.wlG, self.bG)
        return outA[:, : self.H], outG[:, : self.H]

    def forward(self, input_tup):
        xA, adjA, xG, adjG = input_tup
        asage, gsage = self._fwd(xA, adjA, xG, adjG)
        return {"Asage": asage, "Gsage": gsage}


# ---------------------------------------------------------------------------
# Deterministic setup
# ---------------------------------------------------------------------------
def ring_mean_adj(n):
    """Dense row-normalized adjacency of an undirected ring graph (mean aggr)."""
    A = np.zeros((n, n), dtype=np.float32)
    for i in range(n):
        A[i, (i + 1) % n] = 1.0
        A[i, (i - 1) % n] = 1.0
    deg = A.sum(axis=1, keepdims=True)
    deg = np.where(deg == 0, 1.0, deg)
    return jnp.asarray(A / deg)


if __name__ == "__main__":
    N = 16   # nodes per (small) molecular graph
    F = 32   # input node-feature dim
    H = 32   # SAGEConv hidden dim

    key = jax.random.PRNGKey(0)
    kxA, kxG, k1, k2, k3, k4 = jax.random.split(key, 6)

    xA = jax.random.normal(kxA, (N, F), dtype=jnp.float32)   # acid-graph nodes
    xG = jax.random.normal(kxG, (N, F), dtype=jnp.float32)   # glycol-graph nodes
    adjA = ring_mean_adj(N)
    adjG = ring_mean_adj(N)

    scale = 1.0 / np.sqrt(F)
    params = {
        "A_wl": jax.random.normal(k1, (F, H), dtype=jnp.float32) * scale,
        "A_wr": jax.random.normal(k2, (F, H), dtype=jnp.float32) * scale,
        "A_b": jnp.zeros((1, H), dtype=jnp.float32),
        "G_wl": jax.random.normal(k3, (F, H), dtype=jnp.float32) * scale,
        "G_wr": jax.random.normal(k4, (F, H), dtype=jnp.float32) * scale,
        "G_b": jnp.zeros((1, H), dtype=jnp.float32),
    }

    extractor = FeatureExtractorPallas(params)
    feats = extractor.forward((xA, adjA, xG, adjG))

    jax.block_until_ready(feats["Asage"])
    jax.block_until_ready(feats["Gsage"])

    # Plain-JAX f32 reference of the kernel math (torch_geometric SAGEConv).
    # Tolerance loosened vs the pure-f32 version: kernel inputs are bf16
    # (f32 accumulation), giving ~1e-2-scale absolute error on O(1) outputs.
    ref_A = (adjA @ xA) @ params["A_wl"] + xA @ params["A_wr"] + params["A_b"]
    ref_G = (adjG @ xG) @ params["G_wl"] + xG @ params["G_wr"] + params["G_b"]
    assert feats["Asage"].shape == (N, H) and feats["Gsage"].shape == (N, H)
    assert jnp.allclose(feats["Asage"], ref_A, atol=3e-2, rtol=3e-2)
    assert jnp.allclose(feats["Gsage"], ref_G, atol=3e-2, rtol=3e-2)

    print("KERNEL_OK")
</pallas_src>

<mosaic_0001>
module attributes {stable_mosaic.version = 11 : i64} {
  func.func @fused_sage_kernel(%arg0: memref<16x32xbf16, #tpu.memory_space<vmem>>, %arg1: memref<16x16xbf16, #tpu.memory_space<vmem>>, %arg2: memref<16x32xbf16, #tpu.memory_space<vmem>>, %arg3: memref<16x16xbf16, #tpu.memory_space<vmem>>, %arg4: memref<32x128xbf16, #tpu.memory_space<vmem>>, %arg5: memref<32x128xbf16, #tpu.memory_space<vmem>>, %arg6: memref<1x128xf32, #tpu.memory_space<vmem>>, %arg7: memref<32x128xbf16, #tpu.memory_space<vmem>>, %arg8: memref<32x128xbf16, #tpu.memory_space<vmem>>, %arg9: memref<1x128xf32, #tpu.memory_space<vmem>>, %arg10: memref<16x128xf32, #tpu.memory_space<vmem>>, %arg11: memref<16x128xf32, #tpu.memory_space<vmem>>) attributes {dimension_semantics = [], scalar_prefetch = 0 : i64, scratch_operands = 0 : i64, tpu.core_type = #tpu.core_type<tc>} {
    %c0 = arith.constant 0 : index
    %c0_0 = arith.constant 0 : index
    %0 = vector.load %arg0[%c0, %c0_0] : memref<16x32xbf16, #tpu.memory_space<vmem>>, vector<16x32xbf16>
    %c0_1 = arith.constant 0 : index
    %c0_2 = arith.constant 0 : index
    %1 = vector.load %arg1[%c0_1, %c0_2] : memref<16x16xbf16, #tpu.memory_space<vmem>>, vector<16x16xbf16>
    %cst = arith.constant dense<0.000000e+00> : vector<16x32xf32>
    %2 = tpu.matmul %1, %0, %cst {dimension_numbers = #tpu.dot_dimension_numbers<[1], [0], [0], [1], [0, 0, 1, 1], [], []>} : vector<16x16xbf16>, vector<16x32xbf16>, vector<16x32xf32> -> vector<16x32xf32>
    %c0_3 = arith.constant 0 : index
    %c0_4 = arith.constant 0 : index
    %3 = vector.load %arg4[%c0_3, %c0_4] : memref<32x128xbf16, #tpu.memory_space<vmem>>, vector<32x128xbf16>
    %cst_5 = arith.constant dense<0.000000e+00> : vector<16x128xf32>
    %4 = tpu.matmul %0, %3, %cst_5 {dimension_numbers = #tpu.dot_dimension_numbers<[1], [0], [0], [1], [0, 0, 1, 1], [], []>} : vector<16x32xbf16>, vector<32x128xbf16>, vector<16x128xf32> -> vector<16x128xf32>
    %5 = arith.truncf %2 : vector<16x32xf32> to vector<16x32xbf16>
    %c0_6 = arith.constant 0 : index
    %c0_7 = arith.constant 0 : index
    %6 = vector.load %arg5[%c0_6, %c0_7] : memref<32x128xbf16, #tpu.memory_space<vmem>>, vector<32x128xbf16>
    %cst_8 = arith.constant dense<0.000000e+00> : vector<16x128xf32>
    %7 = tpu.matmul %5, %6, %cst_8 {dimension_numbers = #tpu.dot_dimension_numbers<[1], [0], [0], [1], [0, 0, 1, 1], [], []>} : vector<16x32xbf16>, vector<32x128xbf16>, vector<16x128xf32> -> vector<16x128xf32>
    %8 = arith.addf %4, %7 : vector<16x128xf32>
    %c0_9 = arith.constant 0 : index
    %c0_10 = arith.constant 0 : index
    %9 = vector.load %arg6[%c0_9, %c0_10] : memref<1x128xf32, #tpu.memory_space<vmem>>, vector<1x128xf32>
    %10 = vector.broadcast %9 : vector<1x128xf32> to vector<16x128xf32>
    %11 = arith.addf %8, %10 : vector<16x128xf32>
    %c0_11 = arith.constant 0 : index
    %c0_12 = arith.constant 0 : index
    %12 = vector.load %arg10[%c0_11, %c0_12] : memref<16x128xf32, #tpu.memory_space<vmem>>, vector<16x128xf32>
    tpu.vector_store %arg10[%c0_11, %c0_12], %11 {strides = array<i32>} : memref<16x128xf32, #tpu.memory_space<vmem>>, vector<16x128xf32>,
    %c0_13 = arith.constant 0 : index
    %c0_14 = arith.constant 0 : index
    %13 = vector.load %arg2[%c0_13, %c0_14] : memref<16x32xbf16, #tpu.memory_space<vmem>>, vector<16x32xbf16>
    %c0_15 = arith.constant 0 : index
    %c0_16 = arith.constant 0 : index
    %14 = vector.load %arg3[%c0_15, %c0_16] : memref<16x16xbf16, #tpu.memory_space<vmem>>, vector<16x16xbf16>
    %cst_17 = arith.constant dense<0.000000e+00> : vector<16x32xf32>
    %15 = tpu.matmul %14, %13, %cst_17 {dimension_numbers = #tpu.dot_dimension_numbers<[1], [0], [0], [1], [0, 0, 1, 1], [], []>} : vector<16x16xbf16>, vector<16x32xbf16>, vector<16x32xf32> -> vector<16x32xf32>
    %c0_18 = arith.constant 0 : index
    %c0_19 = arith.constant 0 : index
    %16 = vector.load %arg7[%c0_18, %c0_19] : memref<32x128xbf16, #tpu.memory_space<vmem>>, vector<32x128xbf16>
    %cst_20 = arith.constant dense<0.000000e+00> : vector<16x128xf32>
    %17 = tpu.matmul %13, %16, %cst_20 {dimension_numbers = #tpu.dot_dimension_numbers<[1], [0], [0], [1], [0, 0, 1, 1], [], []>} : vector<16x32xbf16>, vector<32x128xbf16>, vector<16x128xf32> -> vector<16x128xf32>
    %18 = arith.truncf %15 : vector<16x32xf32> to vector<16x32xbf16>
    %c0_21 = arith.constant 0 : index
    %c0_22 = arith.constant 0 : index
    %19 = vector.load %arg8[%c0_21, %c0_22] : memref<32x128xbf16, #tpu.memory_space<vmem>>, vector<32x128xbf16>
    %cst_23 = arith.constant dense<0.000000e+00> : vector<16x128xf32>
    %20 = tpu.matmul %18, %19, %cst_23 {dimension_numbers = #tpu.dot_dimension_numbers<[1], [0], [0], [1], [0, 0, 1, 1], [], []>} : vector<16x32xbf16>, vector<32x128xbf16>, vector<16x128xf32> -> vector<16x128xf32>
    %21 = arith.addf %17, %20 : vector<16x128xf32>
    %c0_24 = arith.constant 0 : index
    %c0_25 = arith.constant 0 : index
    %22 = vector.load %arg9[%c0_24, %c0_25] : memref<1x128xf32, #tpu.memory_space<vmem>>, vector<1x128xf32>
    %23 = vector.broadcast %22 : vector<1x128xf32> to vector<16x128xf32>
    %24 = arith.addf %21, %23 : vector<16x128xf32>
    %c0_26 = arith.constant 0 : index
    %c0_27 = arith.constant 0 : index
    %25 = vector.load %arg11[%c0_26, %c0_27] : memref<16x128xf32, #tpu.memory_space<vmem>>, vector<16x128xf32>
    tpu.vector_store %arg11[%c0_26, %c0_27], %24 {strides = array<i32>} : memref<16x128xf32, #tpu.memory_space<vmem>>, vector<16x128xf32>,
    return
  }
}

</mosaic_0001>

<llo_original>
// kernel: _forward_impl.1
$region0: #{_forward_impl.1}
  #allocation0 [shape = 'u32[]', space=smem, size = 0x4, offset = 0x4, fixed_abs, tag = 'smem constant byte address 0x4 - core index']
  #allocation1 [shape = 'u32[144,128]{1,0:T(1,128)}', space=vmem, size = 0x12000, scoped, tag = 'internal scratch']
  %s0 = inlined_call_operand.vmem [shape: bf16[16,32], index: 0, kind: input, shape index: {}]
  %s1 = inlined_call_operand.vmem [shape: bf16[16,16], index: 1, kind: input, shape index: {}]
  %s2 = inlined_call_operand.vmem [shape: bf16[16,32], index: 2, kind: input, shape index: {}]
  %s3 = inlined_call_operand.vmem [shape: bf16[16,16], index: 3, kind: input, shape index: {}]
  %s4 = inlined_call_operand.vmem [shape: bf16[32,128], index: 4, kind: input, shape index: {}]
  %s5 = inlined_call_operand.vmem [shape: bf16[32,128], index: 5, kind: input, shape index: {}]
  %s6 = inlined_call_operand.vmem [shape: f32[1,128], index: 6, kind: input, shape index: {}, may-alias: {6,9}]
  %s7 = inlined_call_operand.vmem [shape: bf16[32,128], index: 7, kind: input, shape index: {}]
  %s8 = inlined_call_operand.vmem [shape: bf16[32,128], index: 8, kind: input, shape index: {}]
  %s9 = inlined_call_operand.vmem [shape: f32[1,128], index: 9, kind: input, shape index: {}, may-alias: {6,9}]
  %s10 = inlined_call_operand.hbm [shape: f32[16,128], index: 10, kind: output, shape index: {0}]
  %s11 = inlined_call_operand.hbm [shape: f32[16,128], index: 11, kind: output, shape index: {1}]
  %12 = xla_tuple %s10, %s11
  %s13 = sld [smem:[#allocation0]]
  $region58: #{_forward_impl.1} parent=0
    _
  %s15 = ssub.s32 1, %s13
  %s16 = scalar_select 0, %s15, %s13
  $region1: #{_forward_impl.1} parent=0
    #allocation2 [shape = 'u8[8192]{0}', space=vmem, size = 0x2000, scoped, tag = 'output window, operand 0, single buffered']
    #allocation3 [shape = 's32[1]{0}', space=sflag, size = 0x4, scoped, tag = 'scoped memory for _forward_impl.1']
    #allocation4 [shape = 'u8[8192]{0}', space=vmem, size = 0x2000, scoped, tag = 'output window, operand 1, single buffered']
    #allocation5 [shape = 's32[1]{0}', space=sflag, size = 0x4, scoped, tag = 'scoped memory for _forward_impl.1']
    %17 = vsyncpa [#allocation3], 0
    %18 = vsyncpa [#allocation5], 0
    // Predicated region
    $region2: #{_forward_impl.1} parent=1 // pred_check
      _
    $region3: #{_forward_impl.1} parent=1 // pred_check_branch
      %20 = sbr.rel (0) target = $region5
    $region4: #{_forward_impl.1} parent=1 // pred_region
      _
    $region5: #{_forward_impl.1} parent=1 // pred_fallthru
      _
    // Predicated region
    $region6: #{_forward_impl.1} parent=1 // pred_check
      _
    $region7: #{_forward_impl.1} parent=1 // pred_check_branch
      %22 = sbr.rel (0) target = $region9
    $region8: #{_forward_impl.1} parent=1 // pred_region
      _
    $region9: #{_forward_impl.1} parent=1 // pred_fallthru
      _
    // Predicated region
    $region10: #{_forward_impl.1} parent=1 // pred_check
      _
    $region11: #{_forward_impl.1} parent=1 // pred_check_branch
      %24 = sbr.rel (0) target = $region13
    $region12: #{_forward_impl.1} parent=1 // pred_region
      _
    $region13: #{_forward_impl.1} parent=1 // pred_fallthru
      _
    // Predicated region
    $region14: #{_forward_impl.1} parent=1 // pred_check
      _
    $region15: #{_forward_impl.1} parent=1 // pred_check_branch
      %26 = sbr.rel (0) target = $region17
    $region16: #{_forward_impl.1} parent=1 // pred_region
      _
    $region17: #{_forward_impl.1} parent=1 // pred_fallthru
      _
    // Predicated region
    $region18: #{_forward_impl.1} parent=1 // pred_check
      _
    $region19: #{_forward_impl.1} parent=1 // pred_check_branch
      %28 = sbr.rel (0) target = $region21
    $region20: #{_forward_impl.1} parent=1 // pred_region
      _
    $region21: #{_forward_impl.1} parent=1 // pred_fallthru
      _
    // Predicated region
    $region22: #{_forward_impl.1} parent=1 // pred_check
      _
    $region23: #{_forward_impl.1} parent=1 // pred_check_branch
      %30 = sbr.rel (0) target = $region25
    $region24: #{_forward_impl.1} parent=1 // pred_region
      _
    $region25: #{_forward_impl.1} parent=1 // pred_fallthru
      _
    // Predicated region
    $region26: #{_forward_impl.1} parent=1 // pred_check
      _
    $region27: #{_forward_impl.1} parent=1 // pred_check_branch
      %32 = sbr.rel (0) target = $region29
    $region28: #{_forward_impl.1} parent=1 // pred_region
      _
    $region29: #{_forward_impl.1} parent=1 // pred_fallthru
      _
    // Predicated region
    $region30: #{_forward_impl.1} parent=1 // pred_check
      _
    $region31: #{_forward_impl.1} parent=1 // pred_check_branch
      %34 = sbr.rel (0) target = $region33
    $region32: #{_forward_impl.1} parent=1 // pred_region
      _
    $region33: #{_forward_impl.1} parent=1 // pred_fallthru
      _
    // Predicated region
    $region34: #{_forward_impl.1} parent=1 // pred_check
      _
    $region35: #{_forward_impl.1} parent=1 // pred_check_branch
      %36 = sbr.rel (0) target = $region37
    $region36: #{_forward_impl.1} parent=1 // pred_region
      _
    $region37: #{_forward_impl.1} parent=1 // pred_fallthru
      _
    // Predicated region
    $region38: #{_forward_impl.1} parent=1 // pred_check
      _
    $region39: #{_forward_impl.1} parent=1 // pred_check_branch
      %38 = sbr.rel (0) target = $region41
    $region40: #{_forward_impl.1} parent=1 // pred_region
      _
    $region41: #{_forward_impl.1} parent=1 // pred_fallthru
      _
    %v40 = vld [vmem:[%s0] sm:$0xf]
    %v41 = vld [vmem:[%s0 + $0x4] sm:$0xf]
    %v42 = vld [vmem:[%s1] sm:$0xf]
    %v43 = vld [vmem:[%s1 + $0x4] sm:$0xf]
    %v46 = vunpack.c.l.b16 %v42
    %v47 = vunpack.c.l.b16 %v43
    %v48 = vpack.c.b16 %v47, %v46
    %v51 = vunpack.c.l.b16 %v40
    %v52 = vunpack.c.l.b16 %v41
    %v53 = vpack.c.b16 %v52, %v51
    %vm55 = vcmask 130048
    %v57 = vsel %vm55, %v48, 0
    %59 = vmatprep.subr.bf16.mxu0 0
    %60 = vmatpush1.bf16.msra.mxu0 %v53
    %61 = vmatprep.subr.bf16.mxu0 0
    %62 = vmatpush1.bf16.msra.mxu0 0
    %63 = vmatprep.subr.bf16.mxu0 0
    %64 = vmatpush1.bf16.msra.mxu0 0
    %65 = vmatprep.subr.bf16.mxu0 0
    %66 = vmatpush1.bf16.msra.mxu0 0
    %67 = vmatprep.subr.bf16.mxu0 0
    %68 = vmatpush1.bf16.msra.mxu0 0
    %69 = vmatprep.subr.bf16.mxu0 0
    %70 = vmatpush1.bf16.msra.mxu0 0
    %71 = vmatprep.subr.bf16.mxu0 0
    %72 = vmatpush1.bf16.msra.mxu0 0
    %73 = vmatprep.subr.bf16.mxu0 0
    %74 = vmatpush1.bf16.msra.mxu0 0
    %75 = vmatprep.subr.bf16.mxu0 0
    %76 = vmatpush1.bf16.msra.mxu0 0
    %77 = vmatprep.subr.bf16.mxu0 0
    %78 = vmatpush1.bf16.msra.mxu0 0
    %79 = vmatprep.subr.bf16.mxu0 0
    %80 = vmatpush1.bf16.msra.mxu0 0
    %81 = vmatprep.subr.bf16.mxu0 0
    %82 = vmatpush1.bf16.msra.mxu0 0
    %83 = vmatprep.subr.bf16.mxu0 0
    %84 = vmatpush1.bf16.msra.mxu0 0
    %85 = vmatprep.subr.bf16.mxu0 0
    %86 = vmatpush1.bf16.msra.mxu0 0
    %87 = vmatprep.subr.bf16.mxu0 0
    %88 = vmatpush1.bf16.msra.mxu0 0
    %89 = vmatprep.subr.bf16.mxu0 0
    %90 = vmatpush1.bf16.msra.mxu0 0
    %91 = vmatprep.mubr.bf16.mxu0 0
    %92 = vmatmul.mubr.bf16.gmra.mrb[0].mxu0 %v57
    %v93 = vpop.f32.mrb[0].mxu0
    %v94 = vadd.f32 0.0, %v93
    %v95 = vpop.f32.mrb[0].mxu0
    %v96 = vpop.f32.mrb[0].mxu0
    %v97 = vadd.f32 0.0, %v96
    %v98 = vpop.f32.mrb[0].mxu0
    %99 = vdwg.mxu0
    %v100 = vld [vmem:[%s4] sm:$0xf]
    %v101 = vld [vmem:[%s4 + $0x4] sm:$0xf]
    %v102 = vld [vmem:[%s4 + $0x8] sm:$0xf]
    %v103 = vld [vmem:[%s4 + $0xc] sm:$0xf]
    %v104 = vpack.c.bf16 %v97, %v94
    %v105 = vld [vmem:[%s5] sm:$0xf]
    %v106 = vld [vmem:[%s5 + $0x4] sm:$0xf]
    %v107 = vld [vmem:[%s5 + $0x8] sm:$0xf]
    %v108 = vld [vmem:[%s5 + $0xc] sm:$0xf]
    %v113 = vunpack.c.l.b16 %v105
    %v114 = vunpack.c.l.b16 %v106
    %v115 = vunpack.c.l.b16 %v107
    %v116 = vunpack.c.l.b16 %v108
    %v117 = vpack.c.b16 %v114, %v113
    %v118 = vpack.c.b16 %v116, %v115
    %vm121 = vcmask 261120
    %v123 = vsel %vm121, %v104, 0
    %125 = vmatprep.subr.bf16.mxu0 0
    %126 = vmatpush1.bf16.msra.mxu0 %v117
    %127 = vmatprep.subr.bf16.mxu0 0
    %128 = vmatpush1.bf16.msra.mxu0 %v118
    %129 = vmatprep.subr.bf16.mxu0 0
    %130 = vmatpush1.bf16.msra.mxu0 0
    %131 = vmatprep.subr.bf16.mxu0 0
    %132 = vmatpush1.bf16.msra.mxu0 0
    %133 = vmatprep.subr.bf16.mxu0 0
    %134 = vmatpush1.bf16.msra.mxu0 0
    %135 = vmatprep.subr.bf16.mxu0 0
    %136 = vmatpush1.bf16.msra.mxu0 0
    %137 = vmatprep.subr.bf16.mxu0 0
    %138 = vmatpush1.bf16.msra.mxu0 0
    %139 = vmatprep.subr.bf16.mxu0 0
    %140 = vmatpush1.bf16.msra.mxu0 0
    %141 = vmatprep.subr.bf16.mxu0 0
    %142 = vmatpush1.bf16.msra.mxu0 0
    %143 = vmatprep.subr.bf16.mxu0 0
    %144 = vmatpush1.bf16.msra.mxu0 0
    %145 = vmatprep.subr.bf16.mxu0 0
    %146 = vmatpush1.bf16.msra.mxu0 0
    %147 = vmatprep.subr.bf16.mxu0 0
    %148 = vmatpush1.bf16.msra.mxu0 0
    %149 = vmatprep.subr.bf16.mxu0 0
    %150 = vmatpush1.bf16.msra.mxu0 0
    %151 = vmatprep.subr.bf16.mxu0 0
    %152 = vmatpush1.bf16.msra.mxu0 0
    %153 = vmatprep.subr.bf16.mxu0 0
    %154 = vmatpush1.bf16.msra.mxu0 0
    %155 = vmatprep.subr.bf16.mxu0 0
    %156 = vmatpush1.bf16.msra.mxu0 0
    %157 = vmatprep.mubr.bf16.mxu0 0
    %158 = vmatmul.mubr.bf16.gmra.mrb[0].mxu0 %v123
    %v159 = vpop.f32.mrb[0].mxu0
    %v160 = vadd.f32 0.0, %v159
    %v161 = vpop.f32.mrb[0].mxu0
    %v162 = vpop.f32.mrb[0].mxu0
    %v163 = vadd.f32 0.0, %v162
    %v164 = vpop.f32.mrb[0].mxu0
    %165 = vdwg.mxu0
    %v170 = vunpack.c.l.b16 %v100
    %v171 = vunpack.c.l.b16 %v101
    %v172 = vunpack.c.l.b16 %v102
    %v173 = vunpack.c.l.b16 %v103
    %v174 = vpack.c.b16 %v171, %v170
    %v175 = vpack.c.b16 %v173, %v172
    %v179 = vsel %vm121, %v53, 0
    %181 = vmatprep.subr.bf16.mxu0 0
    %182 = vmatpush1.bf16.msra.mxu0 %v174
    %183 = vmatprep.subr.bf16.mxu0 0
    %184 = vmatpush1.bf16.msra.mxu0 %v175
    %185 = vmatprep.subr.bf16.mxu0 0
    %186 = vmatpush1.bf16.msra.mxu0 0
    %187 = vmatprep.subr.bf16.mxu0 0
    %188 = vmatpush1.bf16.msra.mxu0 0
    %189 = vmatprep.subr.bf16.mxu0 0
    %190 = vmatpush1.bf16.msra.mxu0 0
    %191 = vmatprep.subr.bf16.mxu0 0
    %192 = vmatpush1.bf16.msra.mxu0 0
    %193 = vmatprep.subr.bf16.mxu0 0
    %194 = vmatpush1.bf16.msra.mxu0 0
    %195 = vmatprep.subr.bf16.mxu0 0
    %196 = vmatpush1.bf16.msra.mxu0 0
    %197 = vmatprep.subr.bf16.mxu0 0
    %198 = vmatpush1.bf16.msra.mxu0 0
    %199 = vmatprep.subr.bf16.mxu0 0
    %200 = vmatpush1.bf16.msra.mxu0 0
    %201 = vmatprep.subr.bf16.mxu0 0
    %202 = vmatpush1.bf16.msra.mxu0 0
    %203 = vmatprep.subr.bf16.mxu0 0
    %204 = vmatpush1.bf16.msra.mxu0 0
    %205 = vmatprep.subr.bf16.mxu0 0
    %206 = vmatpush1.bf16.msra.mxu0 0
    %207 = vmatprep.subr.bf16.mxu0 0
    %208 = vmatpush1.bf16.msra.mxu0 0
    %209 = vmatprep.subr.bf16.mxu0 0
    %210 = vmatpush1.bf16.msra.mxu0 0
    %211 = vmatprep.subr.bf16.mxu0 0
    %212 = vmatpush1.bf16.msra.mxu0 0
    %213 = vmatprep.mubr.bf16.mxu0 0
    %214 = vmatmul.mubr.bf16.gmra.mrb[0].mxu0 %v179
    %v215 = vpop.f32.mrb[0].mxu0
    %v216 = vadd.f32 %v160, %v215
    %v217 = vpop.f32.mrb[0].mxu0
    %v218 = vpop.f32.mrb[0].mxu0
    %v219 = vadd.f32 %v163, %v218
    %v220 = vpop.f32.mrb[0].mxu0
    %221 = vdwg.mxu0
    %v222 = vld [vmem:[%s6] sm:$0x1]
    %v224 = vlaneseq
    %v225 = vshrl.u32 %v224, 7
    %v226 = vsub.s32 0, %v225
    %v227 = vrot.slane %v222, %v226
    %v229 = vadd.f32 %v216, %v227
    %v230 = vadd.f32 %v219, %v227
    %231 = vst [vmem:[#allocation2] sm:$0xff] %v229
    %232 = vst [vmem:[#allocation2 + $0x8] sm:$0xff] %v230
    %v233 = vld [vmem:[%s2] sm:$0xf]
    %v234 = vld [vmem:[%s2 + $0x4] sm:$0xf]
    %v235 = vld [vmem:[%s3] sm:$0xf]
    %v236 = vld [vmem:[%s3 + $0x4] sm:$0xf]
    %v239 = vunpack.c.l.b16 %v235
    %v240 = vunpack.c.l.b16 %v236
    %v241 = vpack.c.b16 %v240, %v239
    %v244 = vunpack.c.l.b16 %v233
    %v245 = vunpack.c.l.b16 %v234
    %v246 = vpack.c.b16 %v245, %v244
    %v249 = vsel %vm55, %v241, 0
    %251 = vmatprep.subr.bf16.mxu0 0
    %252 = vmatpush1.bf16.msra.mxu0 %v246
    %253 = vmatprep.subr.bf16.mxu0 0
    %254 = vmatpush1.bf16.msra.mxu0 0
    %255 = vmatprep.subr.bf16.mxu0 0
    %256 = vmatpush1.bf16.msra.mxu0 0
    %257 = vmatprep.subr.bf16.mxu0 0
    %258 = vmatpush1.bf16.msra.mxu0 0
    %259 = vmatprep.subr.bf16.mxu0 0
    %260 = vmatpush1.bf16.msra.mxu0 0
    %261 = vmatprep.subr.bf16.mxu0 0
    %262 = vmatpush1.bf16.msra.mxu0 0
    %263 = vmatprep.subr.bf16.mxu0 0
    %264 = vmatpush1.bf16.msra.mxu0 0
    %265 = vmatprep.subr.bf16.mxu0 0
    %266 = vmatpush1.bf16.msra.mxu0 0
    %267 = vmatprep.subr.bf16.mxu0 0
    %268 = vmatpush1.bf16.msra.mxu0 0
    %269 = vmatprep.subr.bf16.mxu0 0
    %270 = vmatpush1.bf16.msra.mxu0 0
    %271 = vmatprep.subr.bf16.mxu0 0
    %272 = vmatpush1.bf16.msra.mxu0 0
    %273 = vmatprep.subr.bf16.mxu0 0
    %274 = vmatpush1.bf16.msra.mxu0 0
    %275 = vmatprep.subr.bf16.mxu0 0
    %276 = vmatpush1.bf16.msra.mxu0 0
    %277 = vmatprep.subr.bf16.mxu0 0
    %278 = vmatpush1.bf16.msra.mxu0 0
    %279 = vmatprep.subr.bf16.mxu0 0
    %280 = vmatpush1.bf16.msra.mxu0 0
    %281 = vmatprep.subr.bf16.mxu0 0
    %282 = vmatpush1.bf16.msra.mxu0 0
    %283 = vmatprep.mubr.bf16.mxu0 0
    %284 = vmatmul.mubr.bf16.gmra.mrb[0].mxu0 %v249
    %v285 = vpop.f32.mrb[0].mxu0
    %v286 = vadd.f32 0.0, %v285
    %v287 = vpop.f32.mrb[0].mxu0
    %v288 = vpop.f32.mrb[0].mxu0
    %v289 = vadd.f32 0.0, %v288
    %v290 = vpop.f32.mrb[0].mxu0
    %291 = vdwg.mxu0
    %v292 = vld [vmem:[%s7] sm:$0xf]
    %v293 = vld [vmem:[%s7 + $0x4] sm:$0xf]
    %v294 = vld [vmem:[%s7 + $0x8] sm:$0xf]
    %v295 = vld [vmem:[%s7 + $0xc] sm:$0xf]
    %v296 = vpack.c.bf16 %v289, %v286
    %v297 = vld [vmem:[%s8] sm:$0xf]
    %v298 = vld [vmem:[%s8 + $0x4] sm:$0xf]
    %v299 = vld [vmem:[%s8 + $0x8] sm:$0xf]
    %v300 = vld [vmem:[%s8 + $0xc] sm:$0xf]
    %v305 = vunpack.c.l.b16 %v297
    %v306 = vunpack.c.l.b16 %v298
    %v307 = vunpack.c.l.b16 %v299
    %v308 = vunpack.c.l.b16 %v300
    %v309 = vpack.c.b16 %v306, %v305
    %v310 = vpack.c.b16 %v308, %v307
    %v314 = vsel %vm121, %v296, 0
    %316 = vmatprep.subr.bf16.mxu0 0
    %317 = vmatpush1.bf16.msra.mxu0 %v309
    %318 = vmatprep.subr.bf16.mxu0 0
    %319 = vmatpush1.bf16.msra.mxu0 %v310
    %320 = vmatprep.subr.bf16.mxu0 0
    %321 = vmatpush1.bf16.msra.mxu0 0
    %322 = vmatprep.subr.bf16.mxu0 0
    %323 = vmatpush1.bf16.msra.mxu0 0
    %324 = vmatprep.subr.bf16.mxu0 0
    %325 = vmatpush1.bf16.msra.mxu0 0
    %326 = vmatprep.subr.bf16.mxu0 0
    %327 = vmatpush1.bf16.msra.mxu0 0
    %328 = vmatprep.subr.bf16.mxu0 0
    %329 = vmatpush1.bf16.msra.mxu0 0
    %330 = vmatprep.subr.bf16.mxu0 0
    %331 = vmatpush1.bf16.msra.mxu0 0
    %332 = vmatprep.subr.bf16.mxu0 0
    %333 = vmatpush1.bf16.msra.mxu0 0
    %334 = vmatprep.subr.bf16.mxu0 0
    %335 = vmatpush1.bf16.msra.mxu0 0
    %336 = vmatprep.subr.bf16.mxu0 0
    %337 = vmatpush1.bf16.msra.mxu0 0
    %338 = vmatprep.subr.bf16.mxu0 0
    %339 = vmatpush1.bf16.msra.mxu0 0
    %340 = vmatprep.subr.bf16.mxu0 0
    %341 = vmatpush1.bf16.msra.mxu0 0
    %342 = vmatprep.subr.bf16.mxu0 0
    %343 = vmatpush1.bf16.msra.mxu0 0
    %344 = vmatprep.subr.bf16.mxu0 0
    %345 = vmatpush1.bf16.msra.mxu0 0
    %346 = vmatprep.subr.bf16.mxu0 0
    %347 = vmatpush1.bf16.msra.mxu0 0
    %348 = vmatprep.mubr.bf16.mxu0 0
    %349 = vmatmul.mubr.bf16.gmra.mrb[0].mxu0 %v314
    %v350 = vpop.f32.mrb[0].mxu0
    %v351 = vadd.f32 0.0, %v350
    %v352 = vpop.f32.mrb[0].mxu0
    %v353 = vpop.f32.mrb[0].mxu0
    %v354 = vadd.f32 0.0, %v353
    %v355 = vpop.f32.mrb[0].mxu0
    %356 = vdwg.mxu0
    %v361 = vunpack.c.l.b16 %v292
    %v362 = vunpack.c.l.b16 %v293
    %v363 = vunpack.c.l.b16 %v294
    %v364 = vunpack.c.l.b16 %v295
    %v365 = vpack.c.b16 %v362, %v361
    %v366 = vpack.c.b16 %v364, %v363
    %v370 = vsel %vm121, %v246, 0
    %372 = vmatprep.subr.bf16.mxu0 0
    %373 = vmatpush1.bf16.msra.mxu0 %v365
    %374 = vmatprep.subr.bf16.mxu0 0
    %375 = vmatpush1.bf16.msra.mxu0 %v366
    %376 = vmatprep.subr.bf16.mxu0 0
    %377 = vmatpush1.bf16.msra.mxu0 0
    %378 = vmatprep.subr.bf16.mxu0 0
    %379 = vmatpush1.bf16.msra.mxu0 0
    %380 = vmatprep.subr.bf16.mxu0 0
    %381 = vmatpush1.bf16.msra.mxu0 0
    %382 = vmatprep.subr.bf16.mxu0 0
    %383 = vmatpush1.bf16.msra.mxu0 0
    %384 = vmatprep.subr.bf16.mxu0 0
    %385 = vmatpush1.bf16.msra.mxu0 0
    %386 = vmatprep.subr.bf16.mxu0 0
    %387 = vmatpush1.bf16.msra.mxu0 0
    %388 = vmatprep.subr.bf16.mxu0 0
    %389 = vmatpush1.bf16.msra.mxu0 0
    %390 = vmatprep.subr.bf16.mxu0 0
    %391 = vmatpush1.bf16.msra.mxu0 0
    %392 = vmatprep.subr.bf16.mxu0 0
    %393 = vmatpush1.bf16.msra.mxu0 0
    %394 = vmatprep.subr.bf16.mxu0 0
    %395 = vmatpush1.bf16.msra.mxu0 0
    %396 = vmatprep.subr.bf16.mxu0 0
    %397 = vmatpush1.bf16.msra.mxu0 0
    %398 = vmatprep.subr.bf16.mxu0 0
    %399 = vmatpush1.bf16.msra.mxu0 0
    %400 = vmatprep.subr.bf16.mxu0 0
    %401 = vmatpush1.bf16.msra.mxu0 0
    %402 = vmatprep.subr.bf16.mxu0 0
    %403 = vmatpush1.bf16.msra.mxu0 0
    %404 = vmatprep.mubr.bf16.mxu0 0
    %405 = vmatmul.mubr.bf16.gmra.mrb[0].mxu0 %v370
    %v406 = vpop.f32.mrb[0].mxu0
    %v407 = vadd.f32 %v351, %v406
    %v408 = vpop.f32.mrb[0].mxu0
    %v409 = vpop.f32.mrb[0].mxu0
    %v410 = vadd.f32 %v354, %v409
    %v411 = vpop.f32.mrb[0].mxu0
    %412 = vdwg.mxu0
    %v413 = vld [vmem:[%s9] sm:$0x1]
    %v415 = vlaneseq
    %v416 = vshrl.u32 %v415, 7
    %v417 = vsub.s32 0, %v416
    %v418 = vrot.slane %v413, %v417
    %v420 = vadd.f32 %v407, %v418
    %v421 = vadd.f32 %v410, %v418
    %422 = vst [vmem:[#allocation4] sm:$0xff] %v420
    %423 = vst [vmem:[#allocation4 + $0x8] sm:$0xff] %v421
    // Predicated region
    $region42: #{_forward_impl.1} parent=1 // pred_check
      _
    $region43: #{_forward_impl.1} parent=1 // pred_check_branch
      %425 = sbr.rel (0) target = $region45
    $region44: #{_forward_impl.1} parent=1 // pred_region
      %s427 = ssub.s32 256, 256
      %428 = vsyncadd [#allocation3], %s427
      %s429 = sshll.u32 [#allocation2], 4
      %s430 = int_to_ptr.vmem [resolvable:$true] %s429
      %435 = dma.vmem_to_hbm [thread:$0]  %s430, 256, %s10, [#allocation3], 128, 128, 8
    $region45: #{_forward_impl.1} parent=1 // pred_fallthru
      _
    // Predicated region
    $region46: #{_forward_impl.1} parent=1 // pred_check
      _
    $region47: #{_forward_impl.1} parent=1 // pred_check_branch
      %437 = sbr.rel (0) target = $region49
    $region48: #{_forward_impl.1} parent=1 // pred_region
      %s439 = ssub.s32 256, 256
      %440 = vsyncadd [#allocation5], %s439
      %s441 = sshll.u32 [#allocation4], 4
      %s442 = int_to_ptr.vmem [resolvable:$true] %s441
      %447 = dma.vmem_to_hbm [thread:$0]  %s442, 256, %s11, [#allocation5], 128, 128, 8
    $region49: #{_forward_impl.1} parent=1 // pred_fallthru
      _
    // Predicated region
    $region50: #{_forward_impl.1} parent=1 // pred_check
      _
    $region51: #{_forward_impl.1} parent=1 // pred_check_branch
      %449 = sbr.rel (0) target = $region53
    $region52: #{_forward_impl.1} parent=1 // pred_region
      %450 = dma.done [#allocation3], 256
    $region53: #{_forward_impl.1} parent=1 // pred_fallthru
      _
    // Predicated region
    $region54: #{_forward_impl.1} parent=1 // pred_check
      _
    $region55: #{_forward_impl.1} parent=1 // pred_check_branch
      %452 = sbr.rel (0) target = $region57
    $region56: #{_forward_impl.1} parent=1 // pred_region
      %453 = dma.done [#allocation5], 256
    $region57: #{_forward_impl.1} parent=1 // pred_fallthru
      _
    %454 = vsyncpa [#allocation3], 1
    %455 = vsyncpa [#allocation5], 1

</llo_original>
